<compile_context>
chip_gen: v7x
topology: tpu7x:2x2x1
jax: 0.10.0
libtpu: 0.0.40
codegen_flags: <defaults>
</compile_context>

<pallas_src>
import functools

import jax
import jax.numpy as jnp
from jax.experimental import pallas as pl
from jax.experimental.pallas import tpu as pltpu

_LANES = 128
_TARGET_BLOCK_BYTES = 4 * 1024 * 1024   # ~4 MiB per (f32 output) block
_MIN_GRID_STEPS = 4                     # keep pipeline + megacore busy
_VMEM_LIMIT_BYTES = 32 * 1024 * 1024    # safe on v5e/v6e/v7x
_DEFAULT_MIN_PALLAS_ELEMS = 256 * 1024  # below this, fused XLA wins


def _apply_act(x, act_name):
    if act_name == "relu":
        return jnp.maximum(x, 0.0)
    elif act_name == "tanh":
        return jnp.tanh(x)
    else:
        raise ValueError(f"unsupported activation: {act_name}")


def _modified_act_kernel(x_ref, o_ref, *, act_name):
    # Forward value == act(x); see header for why zp * (z / zp) is dropped.
    x = x_ref[...].astype(jnp.float32)
    o_ref[...] = _apply_act(x, act_name).astype(o_ref.dtype)


def _choose_tiling(n):
    """Pick a lane-dense (rows, cols) slab and rows-per-block for the grid."""
    cols = _LANES
    for cand in (2048, 1024, 512, 256, 128):
        if n % cand == 0:
            cols = cand
            break
    rows = n // cols
    if rows <= 8:
        # Single block covering the full (tiny) row extent.
        return rows, cols, rows

    # Rows per block from the VMEM byte target (multiple of 8 sublanes),
    # sized on the 4-byte f32 output (the larger side for bf16 inputs).
    block_rows = max(8, (_TARGET_BLOCK_BYTES // (cols * 4)) // 8 * 8)

    # Keep at least _MIN_GRID_STEPS steps when the data allows it, so the
    # pipeline overlaps DMA/compute and v7x shards the axis across both TCs.
    rows_per_step = -(-rows // _MIN_GRID_STEPS)            # ceil
    rows_for_min_steps = max(8, ((rows_per_step + 7) // 8) * 8)
    block_rows = min(block_rows, rows_for_min_steps)
    return rows, cols, block_rows


def modified_act(x, act_name="relu", *, min_pallas_elems=_DEFAULT_MIN_PALLAS_ELEMS):
    """Pallas TPU implementation of ModifiedAct.forward.

    Output dtype is float32 (matching the trailing .float() in the module).
    Small or ragged (size not a multiple of 128) inputs take a single fused
    pure-JAX elementwise op instead of a kernel launch.
    """
    orig_shape = x.shape
    n = x.size

    # Fast path: tiny inputs (launch/plumbing overhead dominates) and ragged
    # sizes (a lane-dense slab would need a materializing pad/slice, doubling
    # HBM traffic).  A fused XLA elementwise op is single-pass and roofline-
    # optimal here.
    if n < max(min_pallas_elems, 1) or (n % _LANES) != 0:
        return _apply_act(x.astype(jnp.float32), act_name).reshape(orig_shape)

    rows, cols, block_rows = _choose_tiling(n)
    x2d = x.reshape(rows, cols)  # contiguous reshape: free bitcast

    kernel = functools.partial(_modified_act_kernel, act_name=act_name)

    out2d = pl.pallas_call(
        kernel,
        out_shape=jax.ShapeDtypeStruct((rows, cols), jnp.float32),
        grid=(pl.cdiv(rows, block_rows),),
        in_specs=[pl.BlockSpec((block_rows, cols), lambda i: (i, 0))],
        out_specs=pl.BlockSpec((block_rows, cols), lambda i: (i, 0)),
        compiler_params=pltpu.CompilerParams(
            dimension_semantics=("parallel",),
            vmem_limit_bytes=_VMEM_LIMIT_BYTES,
        ),
    )(x2d)

    return out2d.reshape(orig_shape)


def modified_act_ref(x, act_name="relu"):
    """Pure-JAX reference: literal zp * (z / zp) formula (f32 emulation of f64)."""
    xf = x.astype(jnp.float32)
    z = _apply_act(xf, act_name)
    zp = xf + ((xf == 0.0).astype(jnp.float32) + jnp.sign(xf)) * jnp.float32(1e-6)
    return zp * (z / zp)


if __name__ == "__main__":
    key = jax.random.PRNGKey(0)

    # Small NCHW input (batch=2, channels=4, spatial=16x16).  Force the Pallas
    # path (the default would route something this small to the fused XLA path).
    x = jax.random.normal(key, (2, 4, 16, 16), dtype=jnp.float32)
    x = x.at[0, 0, 0, :4].set(0.0)  # exercise the (x == 0) stabilizer branch

    out = jax.block_until_ready(modified_act(x, "relu", min_pallas_elems=0))
    ref = modified_act_ref(x, "relu")
    assert out.shape == x.shape and out.dtype == jnp.float32
    assert jnp.allclose(out, ref, atol=1e-6, rtol=1e-5), "relu mismatch vs reference"

    out_t = jax.block_until_ready(modified_act(x, "tanh", min_pallas_elems=0))
    ref_t = modified_act_ref(x, "tanh")
    assert jnp.allclose(out_t, ref_t, atol=1e-6, rtol=1e-5), "tanh mismatch vs reference"

    # Medium input that takes the Pallas path by default with a multi-step
    # "parallel" grid (exercises pipelining / partial-final-block masking).
    xm = jax.random.normal(jax.random.PRNGKey(1), (8, 32, 32, 32), dtype=jnp.float32)
    outm = jax.block_until_ready(modified_act(xm, "relu"))
    refm = modified_act_ref(xm, "relu")
    assert jnp.allclose(outm, refm, atol=1e-6, rtol=1e-5), "medium-size mismatch"

    # bf16 input through the kernel path (native dtype in HBM, f32 out).
    xb = jax.random.normal(jax.random.PRNGKey(2), (4, 8, 16, 16), dtype=jnp.bfloat16)
    outb = jax.block_until_ready(modified_act(xb, "tanh", min_pallas_elems=0))
    refb = modified_act_ref(xb, "tanh")
    assert outb.dtype == jnp.float32
    assert jnp.allclose(outb, refb, atol=1e-6, rtol=1e-5), "bf16-input mismatch"

    # Ragged size (not a multiple of 128): fused pure-JAX fallback, 1x traffic.
    xr = jax.random.normal(jax.random.PRNGKey(3), (3, 5, 7, 11), dtype=jnp.float32)
    outr = jax.block_until_ready(modified_act(xr, "relu"))
    refr = modified_act_ref(xr, "relu")
    assert outr.shape == xr.shape
    assert jnp.allclose(outr, refr, atol=1e-6, rtol=1e-5), "ragged-size mismatch"

    print("KERNEL_OK")
</pallas_src>

<mosaic_0001>
module attributes {stable_mosaic.version = 11 : i64} {
  func.func @_modified_act_kernel(%arg0: i32, %arg1: memref<1x2048xf32, #tpu.memory_space<vmem>>, %arg2: memref<1x2048xf32, #tpu.memory_space<vmem>>) attributes {dimension_semantics = [#tpu.dimension_semantics<parallel>], iteration_bounds = array<i64: 1>, scalar_prefetch = 0 : i64, scratch_operands = 0 : i64, tpu.core_type = #tpu.core_type<tc>, window_params = [{transform_indices = @transform_0, window_bounds = array<i64: 1, 2048>}, {transform_indices = @transform_1, window_bounds = array<i64: 1, 2048>}]} {
    %c0 = arith.constant 0 : index
    %c0_0 = arith.constant 0 : index
    %0 = vector.load %arg1[%c0, %c0_0] : memref<1x2048xf32, #tpu.memory_space<vmem>>, vector<1x2048xf32>
    %cst = arith.constant 0.000000e+00 : f32
    %1 = vector.broadcast %cst : f32 to vector<1x2048xf32>
    %2 = arith.maximumf %0, %1 : vector<1x2048xf32>
    %c0_1 = arith.constant 0 : index
    %c0_2 = arith.constant 0 : index
    %3 = vector.load %arg2[%c0_1, %c0_2] : memref<1x2048xf32, #tpu.memory_space<vmem>>, vector<1x2048xf32>
    tpu.vector_store %arg2[%c0_1, %c0_2], %2 {strides = array<i32>} : memref<1x2048xf32, #tpu.memory_space<vmem>>, vector<1x2048xf32>,
    return
  }
  func.func @transform_0(%arg0: i32) -> (i32, i32) {
    %c0_i32 = arith.constant 0 : i32
    %c0_i32_0 = arith.constant 0 : i32
    return %arg0, %c0_i32 : i32, i32
  }
  func.func @transform_1(%arg0: i32) -> (i32, i32) {
    %c0_i32 = arith.constant 0 : i32
    %c0_i32_0 = arith.constant 0 : i32
    return %arg0, %c0_i32 : i32, i32
  }
}

</mosaic_0001>

<llo_original>
// kernel: tpu_custom_call.1
$region0: #{tpu_custom_call.1}
  #allocation0 [shape = 'u32[]', space=smem, size = 0x4, offset = 0x4, fixed_abs, tag = 'smem constant byte address 0x4 - core index']
  #allocation1 [shape = 'u32[144,128]{1,0:T(1,128)}', space=vmem, size = 0x12000, scoped, tag = 'internal scratch']
  %s0 = inlined_call_operand.hbm [shape: f32[1,2048], index: 0, kind: input, shape index: {}]
  %s1 = inlined_call_operand.hbm [shape: f32[1,2048], index: 1, kind: output, shape index: {}]
  %s2 = sld [smem:[#allocation0]]
  $region18: #{tpu_custom_call.1} parent=0
    _
  %s4 = ssub.s32 1, %s2
  %s5 = scalar_select 0, %s4, %s2
  $region1: #{tpu_custom_call.1} parent=0
    #allocation2 [shape = 'u8[8192]{0}', space=vmem, size = 0x2000, scoped, tag = 'input window, operand 0, single buffered']
    #allocation3 [shape = 's32[1]{0}', space=sflag, size = 0x4, scoped, tag = 'scoped memory for tpu_custom_call.1']
    #allocation4 [shape = 's32[1]{0}', space=sflag, size = 0x4, scoped, tag = 'scoped memory for tpu_custom_call.1']
    #allocation5 [shape = 'u8[8192]{0}', space=vmem, size = 0x2000, scoped, tag = 'output window, operand 0, single buffered']
    %6 = vsyncpa [#allocation3], 0
    %7 = vsyncpa [#allocation4], 0
    // Predicated region
    $region2: #{tpu_custom_call.1} parent=1 // pred_check
      _
    $region3: #{tpu_custom_call.1} parent=1 // pred_check_branch
      %9 = sbr.rel (0) target = $region5
    $region4: #{tpu_custom_call.1} parent=1 // pred_region
      %s11 = ssub.s32 256, 256
      %12 = vsyncadd [#allocation3], %s11
      %s14 = sshll.u32 [#allocation2], 4
      %s15 = int_to_ptr.vmem [resolvable:$true] %s14
      %17 = dma.hbm_to_vmem [thread:$0]  %s0, 256, %s15, [#allocation3]
    $region5: #{tpu_custom_call.1} parent=1 // pred_fallthru
      _
    // Predicated region
    $region6: #{tpu_custom_call.1} parent=1 // pred_check
      _
    $region7: #{tpu_custom_call.1} parent=1 // pred_check_branch
      %19 = sbr.rel (0) target = $region9
    $region8: #{tpu_custom_call.1} parent=1 // pred_region
      %20 = dma.done [#allocation3], 256
    $region9: #{tpu_custom_call.1} parent=1 // pred_fallthru
      _
    %v21 = vld [vmem:[#allocation2] sm:$0xff]
    %v22 = vld [vmem:[#allocation2 + $0x8] sm:$0xff]
    %v23 = vmax.f32 %v21, 0.0
    %v24 = vmax.f32 %v22, 0.0
    %25 = vst [vmem:[#allocation5] sm:$0xff] %v23
    %26 = vst [vmem:[#allocation5 + $0x8] sm:$0xff] %v24
    // Predicated region
    $region10: #{tpu_custom_call.1} parent=1 // pred_check
      _
    $region11: #{tpu_custom_call.1} parent=1 // pred_check_branch
      %28 = sbr.rel (0) target = $region13
    $region12: #{tpu_custom_call.1} parent=1 // pred_region
      %s30 = ssub.s32 256, 256
      %31 = vsyncadd [#allocation4], %s30
      %s33 = sshll.u32 [#allocation5], 4
      %s34 = int_to_ptr.vmem [resolvable:$true] %s33
      %36 = dma.vmem_to_hbm [thread:$0]  %s34, 256, %s1, [#allocation4]
    $region13: #{tpu_custom_call.1} parent=1 // pred_fallthru
      _
    // Predicated region
    $region14: #{tpu_custom_call.1} parent=1 // pred_check
      _
    $region15: #{tpu_custom_call.1} parent=1 // pred_check_branch
      %38 = sbr.rel (0) target = $region17
    $region16: #{tpu_custom_call.1} parent=1 // pred_region
      %39 = dma.done [#allocation4], 256
    $region17: #{tpu_custom_call.1} parent=1 // pred_fallthru
      _
    %40 = vsyncpa [#allocation3], 1
    %41 = vsyncpa [#allocation4], 1

</llo_original>
